<compile_context>
chip_gen: v7x
topology: tpu7x:2x2x1
jax: 0.10.0
libtpu: 0.0.40
codegen_flags: <defaults>
</compile_context>

<pallas_src>
import functools
import math

import jax
import jax.numpy as jnp
from jax import lax
from jax.experimental import pallas as pl
from jax.experimental.pallas import tpu as pltpu

LN_EPS = 1e-5


def _vmem_limit_bytes():
    """Generation-aware VMEM limit: stay safely below physical VMEM (64 MiB on v7x)."""
    try:
        phys = int(getattr(pltpu.get_tpu_info(), "vmem_capacity_bytes",
                           64 * 1024 * 1024))
    except Exception:
        phys = 64 * 1024 * 1024          # conservative (v7x-sized) default
    return min(phys - 8 * 1024 * 1024, int(phys * 0.9))


def _largest_divisor(n, cap):
    """Largest tile t <= cap dividing n with t == n or t % 8 == 0 (layout-legal)."""
    if n <= cap:
        return n
    for t in range(cap, 7, -1):
        if n % t == 0 and t % 8 == 0:
            return t
    # TODO(synk): pad L to a tileable size instead of falling back to an
    # untiled block for awkwardly-factored very large L (could VMEM-OOM).
    return n


def _bias_vmem_estimate(L, Zd, H, tq_b):
    bf, f32 = 2, 4
    return (2 * tq_b * L * Zd * bf          # z block (double-buffered, bf16)
            + 2 * H * tq_b * L * bf         # bT output block
            + 2 * tq_b * L * Zd * f32       # f32 LayerNorm intermediates
            + 2 * H * Zd * bf)              # wzT


def _attn_vmem_estimate(L, D, H, HC, tq, bias_resident, out_itemsize):
    bf, f32 = 2, 4
    bias_rows = L if bias_resident else tq
    return (2 * L * D * bf                    # m block (bf16, double-buffered)
            + 2 * H * bias_rows * L * bf      # pair-bias block(s)
            + 2 * (D * 4 * HC + HC * D) * bf  # fused qkvg + output weights
            + 2 * tq * D * out_itemsize       # output block
            + 4 * L * HC * bf                 # q/k/v/g scratch (bf16)
            + L * 4 * HC * f32                # qi==0 fused-projection intermediate
            + 2 * tq * L * f32)               # per-head att working set (rough)


# ----------------------------------------------------------------------------
# Kernel 1: pair bias, emitted transposed & lane-dense.
#   bT[h, q, v] = (zlinear(LayerNorm(z)))[q, v, h]
# One dot_general + one full-block store per tile of tq_b query rows.
# ----------------------------------------------------------------------------
def z_bias_kernel(z_ref, lnz_g_ref, lnz_b_ref, wzT_ref, bT_ref):
    TQ, L, Zd = z_ref.shape
    H = bT_ref.shape[0]

    zf = z_ref[...].astype(jnp.float32)                            # (TQ, L, Zd)
    mu = jnp.mean(zf, axis=-1, keepdims=True)
    var = jnp.mean(jnp.square(zf - mu), axis=-1, keepdims=True)
    zn = (zf - mu) * lax.rsqrt(var + LN_EPS)
    zn = (zn * lnz_g_ref[...] + lnz_b_ref[...]).astype(jnp.bfloat16)

    # bT[h, t, l] = sum_d wzT[h, d] * zn[t, l, d] as one MXU matmul.
    zn2 = zn.reshape(TQ * L, Zd)                                   # (TQ*L, Zd)
    bt = lax.dot_general(wzT_ref[...], zn2,
                         (((1,), (1,)), ((), ())),
                         preferred_element_type=jnp.float32)       # (H, TQ*L)
    bT_ref[...] = bt.reshape(H, TQ, L).astype(bT_ref.dtype)


# ----------------------------------------------------------------------------
# Kernel 2: MSA-row attention. grid = (N, L // TQ).
#   qi == 0 : LayerNorm(m) + fused q/k/v/g projection for the FULL row into
#             persistent VMEM scratch (1/sqrt(c) already folded into wq).
#   every qi: per-head (q_tile k^T + bias) -> SignedSqrt -> softmax -> @ v,
#             concatenated across heads, gated, one output projection.
# ----------------------------------------------------------------------------
def msa_row_kernel(bias_resident, m_ref, bT_ref, ln_g_ref, ln_b_ref,
                   w_qkvg_ref, bg_ref, wo_ref, bo_ref, out_ref,
                   q_sc, k_sc, v_sc, g_sc):
    qi = pl.program_id(1)
    L, HC = k_sc.shape
    TQ = out_ref.shape[1]
    H = bT_ref.shape[0]
    c = HC // H

    # ---- once per MSA row: LayerNorm + fused QKVG projection (one wide matmul)
    @pl.when(qi == 0)
    def _():
        m = m_ref[0].astype(jnp.float32)                           # (L, D)
        mu = jnp.mean(m, axis=-1, keepdims=True)
        var = jnp.mean(jnp.square(m - mu), axis=-1, keepdims=True)
        mh = (m - mu) * lax.rsqrt(var + LN_EPS)
        mh = mh * ln_g_ref[...] + ln_b_ref[...]                    # (L, D)
        # TODO(synk): chunk this matmul over L (lax.fori_loop) to bound the
        # (L, 4*HC) f32 live intermediate at very large L.
        qkvg = jnp.dot(mh.astype(jnp.bfloat16), w_qkvg_ref[...],
                       preferred_element_type=jnp.float32)         # (L, 4*HC)
        q_sc[...] = qkvg[:, 0 * HC:1 * HC].astype(jnp.bfloat16)    # scale folded in
        k_sc[...] = qkvg[:, 1 * HC:2 * HC].astype(jnp.bfloat16)
        v_sc[...] = qkvg[:, 2 * HC:3 * HC].astype(jnp.bfloat16)
        g_sc[...] = jax.nn.sigmoid(
            qkvg[:, 3 * HC:4 * HC] + bg_ref[...]).astype(jnp.bfloat16)

    q0 = pl.multiple_of(qi * TQ, TQ)
    q_tile = q_sc[pl.ds(q0, TQ), :]                                # (TQ, HC) bf16
    g_tile = g_sc[pl.ds(q0, TQ), :].astype(jnp.float32)            # (TQ, HC) f32
    k_all = k_sc[...]                                              # (L, HC)  bf16
    v_all = v_sc[...]                                              # (L, HC)  bf16

    # TODO(synk): batch the H small matmuls through one head-batched dot_general
    # (and/or lax.fori_loop for very large L) once a relayout-free (H, *, c)
    # scratch layout is in place; unrolled per-head slices are fine at these sizes.
    o_heads = []
    for h in range(H):
        lo, hi = h * c, (h + 1) * c
        # q_h @ k_h^T without materializing a transpose of k_h.
        att = lax.dot_general(
            q_tile[:, lo:hi], k_all[:, lo:hi],
            (((1,), (1,)), ((), ())),
            preferred_element_type=jnp.float32)                    # (TQ, L)
        if bias_resident:
            att = att + bT_ref[h, pl.ds(q0, TQ), :].astype(jnp.float32)
        else:
            att = att + bT_ref[h].astype(jnp.float32)
        # SignedSqrt with a single sqrt: sign(x) * sqrt(|x|).
        s = jnp.sqrt(jnp.abs(att))
        att = jnp.where(att >= 0, s, -s)
        # softmax over keys; divide goes to the EUP.
        att = att - jnp.max(att, axis=-1, keepdims=True)
        e = jnp.exp(att)
        att = e * pl.reciprocal(jnp.sum(e, axis=-1, keepdims=True), approx=True)
        o_heads.append(jnp.dot(att.astype(jnp.bfloat16), v_all[:, lo:hi],
                               preferred_element_type=jnp.float32))  # (TQ, c)

    o = jnp.concatenate(o_heads, axis=-1) * g_tile                 # (TQ, HC) f32
    out_ref[0] = (jnp.dot(o.astype(jnp.bfloat16), wo_ref[...],
                          preferred_element_type=jnp.float32)
                  + bo_ref[...]).astype(out_ref.dtype)


# ----------------------------------------------------------------------------
# Wrapper
# ----------------------------------------------------------------------------
def msa_row_pallas(m, z, p):
    N, L, D = m.shape
    Lq, Lv, Zd = z.shape
    assert Lq == L and Lv == L
    H = int(p["N_head"])
    HC = p["wq"].shape[1]
    c = HC // H
    out_dtype = m.dtype

    vmem_limit = _vmem_limit_bytes()
    budget = int(0.85 * vmem_limit)

    # m / z enter the kernels in bf16 (halves the dominant HBM reads).
    m_bf = m.astype(jnp.bfloat16)
    z_bf = z.astype(jnp.bfloat16)

    # Pre-packed parameters (in a real model these would be packed once).
    # The 1/sqrt(c) attention scale is folded into the wq columns.
    w_qkvg = jnp.concatenate(
        [p["wq"] * (1.0 / math.sqrt(c)), p["wk"], p["wv"], p["wg"]],
        axis=1).astype(jnp.bfloat16)                               # (D, 4*HC)
    wo = p["wo"].astype(jnp.bfloat16)                              # (HC, D)
    wzT = p["wz"].T.astype(jnp.bfloat16)                           # (H, Zd)

    # ---- kernel 1: pair bias, transposed + lane-dense + bf16 ----
    tq_b = None
    for cap in (32, 16, 8):                   # multiples of 16 preferred (bf16 pack)
        t = _largest_divisor(L, cap)
        if _bias_vmem_estimate(L, Zd, H, t) <= budget:
            tq_b = t
            break
    if tq_b is None:
        tq_b = _largest_divisor(L, 8)

    bT = pl.pallas_call(
        z_bias_kernel,
        out_shape=jax.ShapeDtypeStruct((H, L, L), jnp.bfloat16),
        grid=(L // tq_b,),
        in_specs=[
            pl.BlockSpec((tq_b, L, Zd), lambda i: (i, 0, 0)),
            pl.BlockSpec((1, Zd), lambda i: (0, 0)),
            pl.BlockSpec((1, Zd), lambda i: (0, 0)),
            pl.BlockSpec((H, Zd), lambda i: (0, 0)),
        ],
        out_specs=pl.BlockSpec((H, tq_b, L), lambda i: (0, i, 0)),
        compiler_params=pltpu.CompilerParams(
            dimension_semantics=("parallel",),
            vmem_limit_bytes=vmem_limit),
    )(z_bf, p["lnz_g"], p["lnz_b"], wzT)

    # ---- kernel 2: query-tiled attention; pair bias VMEM-resident where it fits ----
    out_isz = jnp.dtype(out_dtype).itemsize
    tq = _largest_divisor(L, 256)             # fills the 256-wide MXU on v6e/v7x
    if _attn_vmem_estimate(L, D, H, HC, tq, False, out_isz) > budget:
        tq = _largest_divisor(L, 128)
    bias_resident = _attn_vmem_estimate(L, D, H, HC, tq, True, out_isz) <= budget

    if bias_resident:
        # Constant block index => the full (H, L, L) bias is DMA'd once and
        # reused across all N * (L/tq) grid steps (no per-row HBM re-stream).
        bias_spec = pl.BlockSpec((H, L, L), lambda n, q: (0, 0, 0))
    else:
        bias_spec = pl.BlockSpec((H, tq, L), lambda n, q: (0, q, 0))

    out = pl.pallas_call(
        functools.partial(msa_row_kernel, bias_resident),
        out_shape=jax.ShapeDtypeStruct((N, L, D), out_dtype),
        grid=(N, L // tq),
        in_specs=[
            pl.BlockSpec((1, L, D), lambda n, q: (n, 0, 0)),       # m (full row)
            bias_spec,                                             # pair bias
            pl.BlockSpec((1, D), lambda n, q: (0, 0)),             # ln gamma
            pl.BlockSpec((1, D), lambda n, q: (0, 0)),             # ln beta
            pl.BlockSpec((D, 4 * HC), lambda n, q: (0, 0)),        # fused qkvg W
            pl.BlockSpec((1, HC), lambda n, q: (0, 0)),            # g bias
            pl.BlockSpec((HC, D), lambda n, q: (0, 0)),            # olinear W
            pl.BlockSpec((1, D), lambda n, q: (0, 0)),             # olinear b
        ],
        out_specs=pl.BlockSpec((1, tq, D), lambda n, q: (n, q, 0)),
        scratch_shapes=[
            pltpu.VMEM((L, HC), jnp.bfloat16),   # q (full row, scale folded in)
            pltpu.VMEM((L, HC), jnp.bfloat16),   # k (full row)
            pltpu.VMEM((L, HC), jnp.bfloat16),   # v (full row)
            pltpu.VMEM((L, HC), jnp.bfloat16),   # sigmoid gate (full row)
        ],
        compiler_params=pltpu.CompilerParams(
            # N: whole MSA rows per core (megacore on v7x); q: reuses per-row scratch.
            dimension_semantics=("parallel", "arbitrary"),
            vmem_limit_bytes=vmem_limit),
    )(m_bf, bT, p["ln1_g"], p["ln1_b"], w_qkvg, p["bg"], wo, p["bo"])
    return out


# ----------------------------------------------------------------------------
# Pure-JAX reference (mirrors the PyTorch forward, eval mode, all f32)
# ----------------------------------------------------------------------------
def msa_row_reference(m, z, p):
    N, L, D = m.shape
    H = p["N_head"]
    c = p["c"]
    sq_c = 1.0 / math.sqrt(c)

    def ln(x, g, b):
        mu = x.mean(-1, keepdims=True)
        var = jnp.square(x - mu).mean(-1, keepdims=True)
        return (x - mu) / jnp.sqrt(var + LN_EPS) * g + b

    mh = ln(m, p["ln1_g"][0], p["ln1_b"][0])
    q = (mh @ p["wq"]).reshape(N, L, H, c)
    k = (mh @ p["wk"]).reshape(N, L, H, c)
    v = (mh @ p["wv"]).reshape(N, L, H, c)
    b = ln(z, p["lnz_g"][0], p["lnz_b"][0]) @ p["wz"]              # (L, L, H)
    g = jax.nn.sigmoid(mh @ p["wg"] + p["bg"][0]).reshape(N, L, H, c)

    att = jnp.einsum('bqhc,bvhc->bqvh', q, k) * sq_c + b[None]
    att = jnp.sqrt(jnp.maximum(att, 0.0)) - jnp.sqrt(jnp.maximum(-att, 0.0))
    att = jax.nn.softmax(att, axis=2)
    o = jnp.einsum('bqvh,bvhc->bqhc', att, v) * g
    return o.reshape(N, L, H * c) @ p["wo"] + p["bo"][0]


# ----------------------------------------------------------------------------
def make_params(key, m_dim, z_dim, N_head=8, c=8):
    HC = N_head * c
    ks = jax.random.split(key, 8)
    rnd = lambda k, shp: (0.1 * jax.random.normal(k, shp)).astype(jnp.float32)
    return {
        "N_head": N_head,
        "c": c,
        "ln1_g": jnp.ones((1, m_dim), jnp.float32),
        "ln1_b": jnp.zeros((1, m_dim), jnp.float32),
        "lnz_g": jnp.ones((1, z_dim), jnp.float32),
        "lnz_b": jnp.zeros((1, z_dim), jnp.float32),
        # Linear weights in (in, out) convention: y = x @ W (+ b)
        "wq": rnd(ks[0], (m_dim, HC)),
        "wk": rnd(ks[1], (m_dim, HC)),
        "wv": rnd(ks[2], (m_dim, HC)),
        "wz": rnd(ks[3], (z_dim, N_head)),
        "wg": rnd(ks[4], (m_dim, HC)),
        "bg": rnd(ks[5], (1, HC)),
        "wo": rnd(ks[6], (HC, m_dim)),
        "bo": rnd(ks[7], (1, m_dim)),
    }


def _run_case(N, L, m_dim, z_dim, N_head=8, c=8):
    key = jax.random.PRNGKey(0)
    k_m, k_z, k_p = jax.random.split(key, 3)
    m = jax.random.normal(k_m, (N, L, m_dim), dtype=jnp.float32)
    z = jax.random.normal(k_z, (L, L, z_dim), dtype=jnp.float32)
    params = make_params(k_p, m_dim, z_dim, N_head, c)

    out = jax.block_until_ready(msa_row_pallas(m, z, params))
    ref = jax.block_until_ready(msa_row_reference(m, z, params))

    assert out.shape == (N, L, m_dim)
    # bf16 inputs + bf16 MXU operands + approx reciprocal vs f32 reference
    # -> loose tolerance (real bugs produce O(1) errors).
    err = float(jnp.max(jnp.abs(out - ref)))
    assert jnp.allclose(out, ref, rtol=1e-1, atol=1e-1), \
        f"case (N={N}, L={L}, D={m_dim}): max abs err = {err}"


if __name__ == "__main__":
    _run_case(2, 8, 32, 16, 8, 8)       # small: single query tile / single bias tile
    _run_case(2, 256, 128, 32, 8, 8)    # exercises query tiling + bias row tiling
    print("KERNEL_OK")
</pallas_src>

<mosaic_0001>
module attributes {stable_mosaic.version = 11 : i64} {
  func.func @z_bias_kernel(%arg0: i32, %arg1: memref<8x8x16xbf16, #tpu.memory_space<vmem>>, %arg2: memref<1x16xf32, #tpu.memory_space<vmem>>, %arg3: memref<1x16xf32, #tpu.memory_space<vmem>>, %arg4: memref<8x16xbf16, #tpu.memory_space<vmem>>, %arg5: memref<8x8x8xbf16, #tpu.memory_space<vmem>>) attributes {dimension_semantics = [#tpu.dimension_semantics<parallel>], iteration_bounds = array<i64: 1>, scalar_prefetch = 0 : i64, scratch_operands = 0 : i64, tpu.core_type = #tpu.core_type<tc>, window_params = [{transform_indices = @transform_0, window_bounds = array<i64: 8, 8, 16>}, {pipeline_mode = #tpu.pipeline_mode<synchronous>, transform_indices = @transform_1, window_bounds = array<i64: 1, 16>}, {pipeline_mode = #tpu.pipeline_mode<synchronous>, transform_indices = @transform_2, window_bounds = array<i64: 1, 16>}, {pipeline_mode = #tpu.pipeline_mode<synchronous>, transform_indices = @transform_3, window_bounds = array<i64: 8, 16>}, {transform_indices = @transform_4, window_bounds = array<i64: 8, 8, 8>}]} {
    %c0 = arith.constant 0 : index
    %c0_0 = arith.constant 0 : index
    %c0_1 = arith.constant 0 : index
    %0 = vector.load %arg1[%c0, %c0_0, %c0_1] : memref<8x8x16xbf16, #tpu.memory_space<vmem>>, vector<8x8x16xbf16>
    %1 = arith.extf %0 : vector<8x8x16xbf16> to vector<8x8x16xf32>
    %cst = arith.constant dense<0.000000e+00> : vector<8x8xf32>
    %2 = vector.multi_reduction <add>, %1, %cst [2] : vector<8x8x16xf32> to vector<8x8xf32>
    %3 = vector.shape_cast %2 : vector<8x8xf32> to vector<8x8x1xf32>
    %cst_2 = arith.constant 1.600000e+01 : f32
    %4 = vector.broadcast %cst_2 : f32 to vector<8x8x1xf32>
    %5 = arith.divf %3, %4 : vector<8x8x1xf32>
    %6 = vector.broadcast %5 : vector<8x8x1xf32> to vector<8x8x16xf32>
    %7 = arith.subf %1, %6 : vector<8x8x16xf32>
    %8 = arith.mulf %7, %7 : vector<8x8x16xf32>
    %cst_3 = arith.constant dense<0.000000e+00> : vector<8x8xf32>
    %9 = vector.multi_reduction <add>, %8, %cst_3 [2] : vector<8x8x16xf32> to vector<8x8xf32>
    %10 = vector.shape_cast %9 : vector<8x8xf32> to vector<8x8x1xf32>
    %cst_4 = arith.constant 1.600000e+01 : f32
    %11 = vector.broadcast %cst_4 : f32 to vector<8x8x1xf32>
    %12 = arith.divf %10, %11 : vector<8x8x1xf32>
    %13 = vector.broadcast %5 : vector<8x8x1xf32> to vector<8x8x16xf32>
    %14 = arith.subf %1, %13 : vector<8x8x16xf32>
    %cst_5 = arith.constant 9.99999974E-6 : f32
    %15 = vector.broadcast %cst_5 : f32 to vector<8x8x1xf32>
    %16 = arith.addf %12, %15 : vector<8x8x1xf32>
    %17 = math.rsqrt %16 : vector<8x8x1xf32>
    %18 = vector.broadcast %17 : vector<8x8x1xf32> to vector<8x8x16xf32>
    %19 = arith.mulf %14, %18 : vector<8x8x16xf32>
    %c0_6 = arith.constant 0 : index
    %c0_7 = arith.constant 0 : index
    %20 = vector.load %arg2[%c0_6, %c0_7] : memref<1x16xf32, #tpu.memory_space<vmem>>, vector<1x16xf32>
    %21 = vector.shape_cast %20 : vector<1x16xf32> to vector<1x1x16xf32>
    %22 = vector.broadcast %21 : vector<1x1x16xf32> to vector<8x8x16xf32>
    %23 = arith.mulf %19, %22 : vector<8x8x16xf32>
    %c0_8 = arith.constant 0 : index
    %c0_9 = arith.constant 0 : index
    %24 = vector.load %arg3[%c0_8, %c0_9] : memref<1x16xf32, #tpu.memory_space<vmem>>, vector<1x16xf32>
    %25 = vector.shape_cast %24 : vector<1x16xf32> to vector<1x1x16xf32>
    %26 = vector.broadcast %25 : vector<1x1x16xf32> to vector<8x8x16xf32>
    %27 = arith.addf %23, %26 : vector<8x8x16xf32>
    %28 = arith.truncf %27 : vector<8x8x16xf32> to vector<8x8x16xbf16>
    %29 = vector.shape_cast %28 : vector<8x8x16xbf16> to vector<64x16xbf16>
    %c0_10 = arith.constant 0 : index
    %c0_11 = arith.constant 0 : index
    %30 = vector.load %arg4[%c0_10, %c0_11] : memref<8x16xbf16, #tpu.memory_space<vmem>>, vector<8x16xbf16>
    %cst_12 = arith.constant dense<0.000000e+00> : vector<8x64xf32>
    %31 = tpu.matmul %30, %29, %cst_12 {dimension_numbers = #tpu.dot_dimension_numbers<[1], [1], [0], [0], [0, 0, 1, 0], [], []>} : vector<8x16xbf16>, vector<64x16xbf16>, vector<8x64xf32> -> vector<8x64xf32>
    %32 = vector.shape_cast %31 : vector<8x64xf32> to vector<8x8x8xf32>
    %33 = arith.truncf %32 : vector<8x8x8xf32> to vector<8x8x8xbf16>
    %c0_13 = arith.constant 0 : index
    %c0_14 = arith.constant 0 : index
    %c0_15 = arith.constant 0 : index
    %34 = vector.load %arg5[%c0_13, %c0_14, %c0_15] : memref<8x8x8xbf16, #tpu.memory_space<vmem>>, vector<8x8x8xbf16>
    tpu.vector_store %arg5[%c0_13, %c0_14, %c0_15], %33 {strides = array<i32>} : memref<8x8x8xbf16, #tpu.memory_space<vmem>>, vector<8x8x8xbf16>,
    return
  }
  func.func @transform_0(%arg0: i32) -> (i32, i32, i32) {
    %c0_i32 = arith.constant 0 : i32
    %c0_i32_0 = arith.constant 0 : i32
    %c0_i32_1 = arith.constant 0 : i32
    return %arg0, %c0_i32, %c0_i32_0 : i32, i32, i32
  }
  func.func @transform_1(%arg0: i32) -> (i32, i32) {
    %c0_i32 = arith.constant 0 : i32
    %c0_i32_0 = arith.constant 0 : i32
    %c0_i32_1 = arith.constant 0 : i32
    return %c0_i32, %c0_i32_0 : i32, i32
  }
  func.func @transform_2(%arg0: i32) -> (i32, i32) {
    %c0_i32 = arith.constant 0 : i32
    %c0_i32_0 = arith.constant 0 : i32
    %c0_i32_1 = arith.constant 0 : i32
    return %c0_i32, %c0_i32_0 : i32, i32
  }
  func.func @transform_3(%arg0: i32) -> (i32, i32) {
    %c0_i32 = arith.constant 0 : i32
    %c0_i32_0 = arith.constant 0 : i32
    %c0_i32_1 = arith.constant 0 : i32
    return %c0_i32, %c0_i32_0 : i32, i32
  }
  func.func @transform_4(%arg0: i32) -> (i32, i32, i32) {
    %c0_i32 = arith.constant 0 : i32
    %c0_i32_0 = arith.constant 0 : i32
    %c0_i32_1 = arith.constant 0 : i32
    return %c0_i32, %arg0, %c0_i32_0 : i32, i32, i32
  }
}

</mosaic_0001>

<llo_original>
// kernel: tpu_custom_call.1
$region0: #{tpu_custom_call.1}
  #allocation0 [shape = 'u32[]', space=smem, size = 0x4, offset = 0x4, fixed_abs, tag = 'smem constant byte address 0x4 - core index']
  #allocation1 [shape = 'u32[144,128]{1,0:T(1,128)}', space=vmem, size = 0x12000, scoped, tag = 'internal scratch']
  %s0 = inlined_call_operand.hbm [shape: bf16[8,8,16], index: 0, kind: input, shape index: {}]
  %s1 = inlined_call_operand.vmem [shape: f32[1,16], index: 1, kind: input, shape index: {}]
  %s2 = inlined_call_operand.vmem [shape: f32[1,16], index: 2, kind: input, shape index: {}]
  %s3 = inlined_call_operand.vmem [shape: bf16[8,16], index: 3, kind: input, shape index: {}]
  %s4 = inlined_call_operand.hbm [shape: bf16[8,8,8], index: 4, kind: output, shape index: {}]
  %s5 = sld [smem:[#allocation0]]
  $region30: #{tpu_custom_call.1} parent=0
    _
  %s7 = ssub.s32 1, %s5
  %s8 = scalar_select 0, %s7, %s5
  $region1: #{tpu_custom_call.1} parent=0
    #allocation2 [shape = 'u8[16384]{0}', space=vmem, size = 0x4000, scoped, tag = 'input window, operand 0, single buffered']
    #allocation3 [shape = 's32[1]{0}', space=sflag, size = 0x4, scoped, tag = 'scoped memory for tpu_custom_call.1']
    #allocation4 [shape = 's32[1]{0}', space=sflag, size = 0x4, scoped, tag = 'scoped memory for tpu_custom_call.1']
    #allocation5 [shape = 'u8[16384]{0}', space=vmem, size = 0x4000, scoped, tag = 'output window, operand 0, single buffered']
    %9 = vsyncpa [#allocation3], 0
    %10 = vsyncpa [#allocation4], 0
    // Predicated region
    $region2: #{tpu_custom_call.1} parent=1 // pred_check
      _
    $region3: #{tpu_custom_call.1} parent=1 // pred_check_branch
      %12 = sbr.rel (0) target = $region5
    $region4: #{tpu_custom_call.1} parent=1 // pred_region
      %s14 = ssub.s32 512, 512
      %15 = vsyncadd [#allocation3], %s14
      %s16 = sshll.u32 [#allocation2], 4
      %s17 = int_to_ptr.vmem [resolvable:$true] %s16
      %22 = dma.hbm_to_vmem [thread:$0]  %s0, 512, %s17, [#allocation3], 64, 64, 4
    $region5: #{tpu_custom_call.1} parent=1 // pred_fallthru
      _
    // Predicated region
    $region6: #{tpu_custom_call.1} parent=1 // pred_check
      _
    $region7: #{tpu_custom_call.1} parent=1 // pred_check_branch
      %24 = sbr.rel (0) target = $region9
    $region8: #{tpu_custom_call.1} parent=1 // pred_region
      _
    $region9: #{tpu_custom_call.1} parent=1 // pred_fallthru
      _
    // Predicated region
    $region10: #{tpu_custom_call.1} parent=1 // pred_check
      _
    $region11: #{tpu_custom_call.1} parent=1 // pred_check_branch
      %26 = sbr.rel (0) target = $region13
    $region12: #{tpu_custom_call.1} parent=1 // pred_region
      _
    $region13: #{tpu_custom_call.1} parent=1 // pred_fallthru
      _
    // Predicated region
    $region14: #{tpu_custom_call.1} parent=1 // pred_check
      _
    $region15: #{tpu_custom_call.1} parent=1 // pred_check_branch
      %28 = sbr.rel (0) target = $region17
    $region16: #{tpu_custom_call.1} parent=1 // pred_region
      _
    $region17: #{tpu_custom_call.1} parent=1 // pred_fallthru
      _
    // Predicated region
    $region18: #{tpu_custom_call.1} parent=1 // pred_check
      _
    $region19: #{tpu_custom_call.1} parent=1 // pred_check_branch
      %30 = sbr.rel (0) target = $region21
    $region20: #{tpu_custom_call.1} parent=1 // pred_region
      %31 = dma.done [#allocation3], 512
    $region21: #{tpu_custom_call.1} parent=1 // pred_fallthru
      _
    %v33 = vld [vmem:[#allocation2] sm:$0xf]
    %v34 = vld [vmem:[#allocation2 + $0x4] sm:$0xf]
    %v35 = vld [vmem:[#allocation2 + $0x8] sm:$0xf]
    %v36 = vld [vmem:[#allocation2 + $0xc] sm:$0xf]
    %v37 = vld [vmem:[#allocation2 + $0x10] sm:$0xf]
    %v38 = vld [vmem:[#allocation2 + $0x14] sm:$0xf]
    %v39 = vld [vmem:[#allocation2 + $0x18] sm:$0xf]
    %v40 = vld [vmem:[#allocation2 + $0x1c] sm:$0xf]
    %v41 = vunpack.c.l.bf16 %v33
    %v42 = vunpack.c.l.bf16 %v34
    %v43 = vunpack.c.l.bf16 %v35
    %v44 = vunpack.c.l.bf16 %v36
    %v45 = vunpack.c.l.bf16 %v37
    %v46 = vunpack.c.l.bf16 %v38
    %v47 = vunpack.c.l.bf16 %v39
    %v48 = vunpack.c.l.bf16 %v40
    %vm49 = vcmask 130048
    %v50 = vsel %vm49, %v41, 0.0
    %51 = vadd.xlane.f32.xlu0 %v50
    %v52 = vpop.xlane.xlu0 %51
    %v53 = vsel %vm49, %v42, 0.0
    %54 = vadd.xlane.f32.xlu0 %v53
    %v55 = vpop.xlane.xlu0 %54
    %v56 = vsel %vm49, %v43, 0.0
    %57 = vadd.xlane.f32.xlu0 %v56
    %v58 = vpop.xlane.xlu0 %57
    %v59 = vsel %vm49, %v44, 0.0
    %60 = vadd.xlane.f32.xlu0 %v59
    %v61 = vpop.xlane.xlu0 %60
    %v62 = vsel %vm49, %v45, 0.0
    %63 = vadd.xlane.f32.xlu0 %v62
    %v64 = vpop.xlane.xlu0 %63
    %v65 = vsel %vm49, %v46, 0.0
    %66 = vadd.xlane.f32.xlu0 %v65
    %v67 = vpop.xlane.xlu0 %66
    %v68 = vsel %vm49, %v47, 0.0
    %69 = vadd.xlane.f32.xlu0 %v68
    %v70 = vpop.xlane.xlu0 %69
    %v71 = vsel %vm49, %v48, 0.0
    %72 = vadd.xlane.f32.xlu0 %v71
    %v73 = vpop.xlane.xlu0 %72
    %v74 = vrcp.pop 16.0
    %v75 = vmul.f32 %v52, %v74
    %v76 = vmul.f32 %v55, %v74
    %v77 = vmul.f32 %v58, %v74
    %v78 = vmul.f32 %v61, %v74
    %v79 = vmul.f32 %v64, %v74
    %v80 = vmul.f32 %v67, %v74
    %v81 = vmul.f32 %v70, %v74
    %v82 = vmul.f32 %v73, %v74
    %v83 = vsub.f32 %v41, %v75
    %v84 = vsub.f32 %v42, %v76
    %v85 = vsub.f32 %v43, %v77
    %v86 = vsub.f32 %v44, %v78
    %v87 = vsub.f32 %v45, %v79
    %v88 = vsub.f32 %v46, %v80
    %v89 = vsub.f32 %v47, %v81
    %v90 = vsub.f32 %v48, %v82
    %v91 = vmul.f32 %v83, %v83
    %v92 = vmul.f32 %v84, %v84
    %v93 = vmul.f32 %v85, %v85
    %v94 = vmul.f32 %v86, %v86
    %v95 = vmul.f32 %v87, %v87
    %v96 = vmul.f32 %v88, %v88
    %v97 = vmul.f32 %v89, %v89
    %v98 = vmul.f32 %v90, %v90
    %v99 = vsel %vm49, %v91, 0.0
    %100 = vadd.xlane.f32.xlu0 %v99
    %v101 = vpop.xlane.xlu0 %100
    %v102 = vsel %vm49, %v92, 0.0
    %103 = vadd.xlane.f32.xlu0 %v102
    %v104 = vpop.xlane.xlu0 %103
    %v105 = vsel %vm49, %v93, 0.0
    %106 = vadd.xlane.f32.xlu0 %v105
    %v107 = vpop.xlane.xlu0 %106
    %v108 = vsel %vm49, %v94, 0.0
    %109 = vadd.xlane.f32.xlu0 %v108
    %v110 = vpop.xlane.xlu0 %109
    %v111 = vsel %vm49, %v95, 0.0
    %112 = vadd.xlane.f32.xlu0 %v111
    %v113 = vpop.xlane.xlu0 %112
    %v114 = vsel %vm49, %v96, 0.0
    %115 = vadd.xlane.f32.xlu0 %v114
    %v116 = vpop.xlane.xlu0 %115
    %v117 = vsel %vm49, %v97, 0.0
    %118 = vadd.xlane.f32.xlu0 %v117
    %v119 = vpop.xlane.xlu0 %118
    %v120 = vsel %vm49, %v98, 0.0
    %121 = vadd.xlane.f32.xlu0 %v120
    %v122 = vpop.xlane.xlu0 %121
    %v123 = vmul.f32 %v101, %v74
    %v124 = vmul.f32 %v104, %v74
    %v125 = vmul.f32 %v107, %v74
    %v126 = vmul.f32 %v110, %v74
    %v127 = vmul.f32 %v113, %v74
    %v128 = vmul.f32 %v116, %v74
    %v129 = vmul.f32 %v119, %v74
    %v130 = vmul.f32 %v122, %v74
    %v131 = vadd.f32 %v123, 1e-05
    %v132 = vadd.f32 %v124, 1e-05
    %v133 = vadd.f32 %v125, 1e-05
    %v134 = vadd.f32 %v126, 1e-05
    %v135 = vadd.f32 %v127, 1e-05
    %v136 = vadd.f32 %v128, 1e-05
    %v137 = vadd.f32 %v129, 1e-05
    %v138 = vadd.f32 %v130, 1e-05
    %v139 = vrsqrt.pop %v131
    %v140 = vrsqrt.pop %v132
    %v141 = vrsqrt.pop %v133
    %v142 = vrsqrt.pop %v134
    %v143 = vrsqrt.pop %v135
    %v144 = vrsqrt.pop %v136
    %v145 = vrsqrt.pop %v137
    %v146 = vrsqrt.pop %v138
    %v147 = vmul.f32 %v83, %v139
    %v148 = vmul.f32 %v84, %v140
    %v149 = vmul.f32 %v85, %v141
    %v150 = vmul.f32 %v86, %v142
    %v151 = vmul.f32 %v87, %v143
    %v152 = vmul.f32 %v88, %v144
    %v153 = vmul.f32 %v89, %v145
    %v154 = vmul.f32 %v90, %v146
    %v155 = vld [vmem:[%s1] sm:$0x1]
    %v157 = vlaneseq
    %v158 = vshrl.u32 %v157, 7
    %v159 = vsub.s32 0, %v158
    %v160 = vrot.slane %v155, %v159
    %v162 = vmul.f32 %v147, %v160
    %v163 = vmul.f32 %v148, %v160
    %v164 = vmul.f32 %v149, %v160
    %v165 = vmul.f32 %v150, %v160
    %v166 = vmul.f32 %v151, %v160
    %v167 = vmul.f32 %v152, %v160
    %v168 = vmul.f32 %v153, %v160
    %v169 = vmul.f32 %v154, %v160
    %v170 = vld [vmem:[%s2] sm:$0x1]
    %v172 = vlaneseq
    %v173 = vshrl.u32 %v172, 7
    %v174 = vsub.s32 0, %v173
    %v175 = vrot.slane %v170, %v174
    %v177 = vadd.f32 %v162, %v175
    %v178 = vadd.f32 %v163, %v175
    %v179 = vadd.f32 %v164, %v175
    %v180 = vadd.f32 %v165, %v175
    %v181 = vadd.f32 %v166, %v175
    %v182 = vadd.f32 %v167, %v175
    %v183 = vadd.f32 %v168, %v175
    %v184 = vadd.f32 %v169, %v175
    %v185 = vpack.c.bf16 %v177, %v177
    %v186 = vpack.c.bf16 %v178, %v178
    %v187 = vpack.c.bf16 %v179, %v179
    %v188 = vpack.c.bf16 %v180, %v180
    %v189 = vpack.c.bf16 %v181, %v181
    %v190 = vpack.c.bf16 %v182, %v182
    %v191 = vpack.c.bf16 %v183, %v183
    %v192 = vpack.c.bf16 %v184, %v184
    %v193 = vld [vmem:[%s3] sm:$0xf]
    %v202 = vunpack.c.l.b16 %v185
    %v203 = vunpack.c.l.b16 %v186
    %v204 = vunpack.c.l.b16 %v187
    %v205 = vunpack.c.l.b16 %v188
    %v206 = vunpack.c.l.b16 %v189
    %v207 = vunpack.c.l.b16 %v190
    %v208 = vunpack.c.l.b16 %v191
    %v209 = vunpack.c.l.b16 %v192
    %v210 = vpack.c.b16 %v203, %v202
    %v211 = vpack.c.b16 %v205, %v204
    %v212 = vpack.c.b16 %v207, %v206
    %v213 = vpack.c.b16 %v209, %v208
    %v215 = vsel %vm49, %v193, 0
    %v218 = vsel %vm49, %v210, 0
    %v221 = vsel %vm49, %v211, 0
    %v224 = vsel %vm49, %v212, 0
    %v227 = vsel %vm49, %v213, 0
    %229 = vmatprep.subr.bf16.mxu0 0
    %230 = vmatpush1.bf16.xpose.msra.mxu0 %v218
    %231 = vmatprep.subr.bf16.mxu0 0
    %232 = vmatpush1.bf16.xpose.msra.mxu0 %v221
    %233 = vmatprep.subr.bf16.mxu0 0
    %234 = vmatpush1.bf16.xpose.msra.mxu0 %v224
    %235 = vmatprep.subr.bf16.mxu0 0
    %236 = vmatpush1.bf16.xpose.msra.mxu0 %v227
    %237 = vmatprep.subr.bf16.mxu0 0
    %238 = vmatpush1.bf16.xpose.msra.mxu0 0
    %239 = vmatprep.subr.bf16.mxu0 0
    %240 = vmatpush1.bf16.xpose.msra.mxu0 0
    %241 = vmatprep.subr.bf16.mxu0 0
    %242 = vmatpush1.bf16.xpose.msra.mxu0 0
    %243 = vmatprep.subr.bf16.mxu0 0
    %244 = vmatpush1.bf16.xpose.msra.mxu0 0
    %245 = vmatprep.subr.bf16.mxu0 0
    %246 = vmatpush1.bf16.xpose.msra.mxu0 0
    %247 = vmatprep.subr.bf16.mxu0 0
    %248 = vmatpush1.bf16.xpose.msra.mxu0 0
    %249 = vmatprep.subr.bf16.mxu0 0
    %250 = vmatpush1.bf16.xpose.msra.mxu0 0
    %251 = vmatprep.subr.bf16.mxu0 0
    %252 = vmatpush1.bf16.xpose.msra.mxu0 0
    %253 = vmatprep.subr.bf16.mxu0 0
    %254 = vmatpush1.bf16.xpose.msra.mxu0 0
    %255 = vmatprep.subr.bf16.mxu0 0
    %256 = vmatpush1.bf16.xpose.msra.mxu0 0
    %257 = vmatprep.subr.bf16.mxu0 0
    %258 = vmatpush1.bf16.xpose.msra.mxu0 0
    %259 = vmatprep.subr.bf16.mxu0 0
    %260 = vmatpush1.bf16.xpose.msra.mxu0 0
    %261 = vmatprep.mubr.bf16.mxu0 0
    %262 = vmatmul.mubr.bf16.gmra.mrb[0].mxu0 %v215
    %v263 = vpop.f32.mrb[0].mxu0
    %v264 = vadd.f32 0.0, %v263
    %v265 = vpop.f32.mrb[0].mxu0
    %v266 = vpop.f32.mrb[0].mxu0
    %v267 = vpop.f32.mrb[0].mxu0
    %268 = vdwg.mxu0
    %270 = vrot.lane.b32.xlu0 %v264, 120
    %v271 = vpop.permute.xlu0 %270
    %273 = vrot.lane.b32.xlu0 %v264, 112
    %v274 = vpop.permute.xlu0 %273
    %276 = vrot.lane.b32.xlu0 %v264, 104
    %v277 = vpop.permute.xlu0 %276
    %279 = vrot.lane.b32.xlu0 %v264, 96
    %v280 = vpop.permute.xlu0 %279
    %282 = vrot.lane.b32.xlu0 %v264, 88
    %v283 = vpop.permute.xlu0 %282
    %285 = vrot.lane.b32.xlu0 %v264, 80
    %v286 = vpop.permute.xlu0 %285
    %288 = vrot.lane.b32.xlu0 %v264, 72
    %v289 = vpop.permute.xlu0 %288
    %v291 = vcombine.low %v264, %v274
    %v292 = vcombine.high %v264, %v274
    %v294 = vunpack.c.l.s4 1983009808
    %v295 = vunpack.c.0.s8 %v294
    %v296 = vlaneseq
    %v297 = vshrl.u32 %v296, 7
    %v298 = vsub.s32 %v295, %v297
    %v299 = vrot.slane %v291, %v298
    %v301 = vunpack.c.l.s4 1983009808
    %v302 = vunpack.c.0.s8 %v301
    %v303 = vlaneseq
    %v304 = vshrl.u32 %v303, 7
    %v305 = vsub.s32 %v302, %v304
    %v306 = vrot.slane %v292, %v305
    %v307 = vcombine.low %v271, %v277
    %v308 = vcombine.high %v271, %v277
    %v310 = vunpack.c.l.s4 1983009808
    %v311 = vunpack.c.0.s8 %v310
    %v312 = vlaneseq
    %v313 = vshrl.u32 %v312, 7
    %v314 = vsub.s32 %v311, %v313
    %v315 = vrot.slane %v307, %v314
    %v317 = vunpack.c.l.s4 1983009808
    %v318 = vunpack.c.0.s8 %v317
    %v319 = vlaneseq
    %v320 = vshrl.u32 %v319, 7
    %v321 = vsub.s32 %v318, %v320
    %v322 = vrot.slane %v308, %v321
    %v323 = vcombine.low %v280, %v286
    %v324 = vcombine.high %v280, %v286
    %v326 = vunpack.c.l.s4 1983009808
    %v327 = vunpack.c.0.s8 %v326
    %v328 = vlaneseq
    %v329 = vshrl.u32 %v328, 7
    %v330 = vsub.s32 %v327, %v329
    %v331 = vrot.slane %v323, %v330
    %v333 = vunpack.c.l.s4 1983009808
    %v334 = vunpack.c.0.s8 %v333
    %v335 = vlaneseq
    %v336 = vshrl.u32 %v335, 7
    %v337 = vsub.s32 %v334, %v336
    %v338 = vrot.slane %v324, %v337
    %v339 = vcombine.low %v283, %v289
    %v340 = vcombine.high %v283, %v289
    %v342 = vunpack.c.l.s4 1983009808
    %v343 = vunpack.c.0.s8 %v342
    %v344 = vlaneseq
    %v345 = vshrl.u32 %v344, 7
    %v346 = vsub.s32 %v343, %v345
    %v347 = vrot.slane %v339, %v346
    %v349 = vunpack.c.l.s4 1983009808
    %v350 = vunpack.c.0.s8 %v349
    %v351 = vlaneseq
    %v352 = vshrl.u32 %v351, 7
    %v353 = vsub.s32 %v350, %v352
    %v354 = vrot.slane %v340, %v353
    %v355 = vcombine.low %v299, %v315
    %v356 = vcombine.high %v299, %v315
    %v358 = vunpack.c.l.s4 1934713408
    %v359 = vunpack.c.0.s8 %v358
    %v360 = vlaneseq
    %v361 = vshrl.u32 %v360, 7
    %v362 = vsub.s32 %v359, %v361
    %v363 = vrot.slane %v355, %v362
    %v365 = vunpack.c.l.s4 1934713408
    %v366 = vunpack.c.0.s8 %v365
    %v367 = vlaneseq
    %v368 = vshrl.u32 %v367, 7
    %v369 = vsub.s32 %v366, %v368
    %v370 = vrot.slane %v356, %v369
    %v371 = vcombine.low %v306, %v322
    %v372 = vcombine.high %v306, %v322
    %v374 = vunpack.c.l.s4 1934713408
    %v375 = vunpack.c.0.s8 %v374
    %v376 = vlaneseq
    %v377 = vshrl.u32 %v376, 7
    %v378 = vsub.s32 %v375, %v377
    %v379 = vrot.slane %v371, %v378
    %v381 = vunpack.c.l.s4 1934713408
    %v382 = vunpack.c.0.s8 %v381
    %v383 = vlaneseq
    %v384 = vshrl.u32 %v383, 7
    %v385 = vsub.s32 %v382, %v384
    %v386 = vrot.slane %v372, %v385
    %v387 = vcombine.low %v331, %v347
    %v388 = vcombine.high %v331, %v347
    %v390 = vunpack.c.l.s4 1934713408
    %v391 = vunpack.c.0.s8 %v390
    %v392 = vlaneseq
    %v393 = vshrl.u32 %v392, 7
    %v394 = vsub.s32 %v391, %v393
    %v395 = vrot.slane %v387, %v394
    %v397 = vunpack.c.l.s4 1934713408
    %v398 = vunpack.c.0.s8 %v397
    %v399 = vlaneseq
    %v400 = vshrl.u32 %v399, 7
    %v401 = vsub.s32 %v398, %v400
    %v402 = vrot.slane %v388, %v401
    %v403 = vcombine.low %v338, %v354
    %v404 = vcombine.high %v338, %v354
    %v406 = vunpack.c.l.s4 1934713408
    %v407 = vunpack.c.0.s8 %v406
    %v408 = vlaneseq
    %v409 = vshrl.u32 %v408, 7
    %v410 = vsub.s32 %v407, %v409
    %v411 = vrot.slane %v403, %v410
    %v413 = vunpack.c.l.s4 1934713408
    %v414 = vunpack.c.0.s8 %v413
    %v415 = vlaneseq
    %v416 = vshrl.u32 %v415, 7
    %v417 = vsub.s32 %v414, %v416
    %v418 = vrot.slane %v404, %v417
    %v419 = vcombine.low %v363, %v395
    %v420 = vcombine.high %v363, %v395
    %v421 = vcombine.low %v370, %v402
    %v422 = vcombine.high %v370, %v402
    %v423 = vcombine.low %v379, %v411
    %v424 = vcombine.high %v379, %v411
    %v425 = vcombine.low %v386, %v418
    %v426 = vcombine.high %v386, %v418
    %v427 = vpack.c.bf16 %v419, %v419
    %v428 = vpack.c.bf16 %v420, %v420
    %v429 = vpack.c.bf16 %v421, %v421
    %v430 = vpack.c.bf16 %v422, %v422
    %v431 = vpack.c.bf16 %v423, %v423
    %v432 = vpack.c.bf16 %v424, %v424
    %v433 = vpack.c.bf16 %v425, %v425
    %v434 = vpack.c.bf16 %v426, %v426
    %vm435 = vcmask 60416
    %436 = vst.msk [vmem:[#allocation5] sm:$0xf] %vm435, %v427
    %437 = vst.msk [vmem:[#allocation5 + $0x4] sm:$0xf] %vm435, %v428
    %438 = vst.msk [vmem:[#allocation5 + $0x8] sm:$0xf] %vm435, %v429
    %439 = vst.msk [vmem:[#allocation5 + $0xc] sm:$0xf] %vm435, %v430
    %440 = vst.msk [vmem:[#allocation5 + $0x10] sm:$0xf] %vm435, %v431
    %441 = vst.msk [vmem:[#allocation5 + $0x14] sm:$0xf] %vm435, %v432
    %442 = vst.msk [vmem:[#allocation5 + $0x18] sm:$0xf] %vm435, %v433
    %443 = vst.msk [vmem:[#allocation5 + $0x1c] sm:$0xf] %vm435, %v434
    // Predicated region
    $region22: #{tpu_custom_call.1} parent=1 // pred_check
      _
    $region23: #{tpu_custom_call.1} parent=1 // pred_check_branch
      %445 = sbr.rel (0) target = $region25
    $region24: #{tpu_custom_call.1} parent=1 // pred_region
      %s447 = ssub.s32 512, 512
      %448 = vsyncadd [#allocation4], %s447
      %s449 = sshll.u32 [#allocation5], 4
      %s450 = int_to_ptr.vmem [resolvable:$true] %s449
      %455 = dma.vmem_to_hbm [thread:$0]  %s450, 512, %s4, [#allocation4], 64, 64, 4
    $region25: #{tpu_custom_call.1} parent=1 // pred_fallthru
      _
    // Predicated region
    $region26: #{tpu_custom_call.1} parent=1 // pred_check
      _
    $region27: #{tpu_custom_call.1} parent=1 // pred_check_branch
      %457 = sbr.rel (0) target = $region29
    $region28: #{tpu_custom_call.1} parent=1 // pred_region
      %458 = dma.done [#allocation4], 512
    $region29: #{tpu_custom_call.1} parent=1 // pred_fallthru
      _
    %459 = vsyncpa [#allocation3], 1
    %460 = vsyncpa [#allocation4], 1

</llo_original>
